<compile_context>
chip_gen: v5e
topology: v5e:2x2
jax: 0.10.0
libtpu: 0.0.40
codegen_flags: <defaults>
</compile_context>

<pallas_src>
import math

import jax
import jax.numpy as jnp
from jax.experimental import pallas as pl
from jax.experimental.pallas import tpu as pltpu


def self_attention_kernel(
    x_ref,                 # (Bb, S, F)  bf16 activations
    wqkv_ref, bqkv_ref,    # (F, 3U) bf16, (1, 3U) f32  (K slice pre-scaled by 1/sqrt(U))
    wo_ref, bo_ref,        # (U, F)  bf16, (1, F)  f32
    wglu_ref, bglu_ref,    # (U, 2F) bf16, (1, 2F) f32  (GLU linear ++ gate)
    gamma_ref, beta_ref,   # (1, F)  f32,  (1, F)  f32
    out_ref,               # (Bb, S, F) f32
):
    Bb, S, F = x_ref.shape
    U = wo_ref.shape[0]

    # Pack all Bb*S rows into the sublane dim so each projection is one wide
    # matmul instead of one tiny matmul per example per weight.
    x = x_ref[...].reshape(Bb * S, F)                                   # bf16

    # --- fused Q/K/V projection: single (Bb*S, F) @ (F, 3U) MXU pass ---
    qkv = jnp.dot(x, wqkv_ref[...], preferred_element_type=jnp.float32)
    qkv = qkv + bqkv_ref[...]
    q = qkv[:, :U]            # (Bb*S, U) f32, unscaled (feeds GLU residual)
    k = qkv[:, U:2 * U]       # already scaled by 1/sqrt(U) via its weights
    v = qkv[:, 2 * U:]

    q_b = q.astype(jnp.bfloat16).reshape(Bb, S, U)
    k_b = k.astype(jnp.bfloat16).reshape(Bb, S, U)
    v_b = v.astype(jnp.bfloat16).reshape(Bb, S, U)

    # --- scaled dot-product attention (batched over the Bb packed examples) ---
    # einsum contracts the last dims directly (trans_b) -> no explicit k.T.
    # TODO(synk): optional attention `mask` argument is not plumbed through (forward runs mask=None).
    # TODO(synk): for large S, replace the full (S, S) scores with a KV-block loop + online softmax.
    scores = jnp.einsum("bqu,bku->bqk", q_b, k_b,
                        preferred_element_type=jnp.float32)             # (Bb, S, S)
    scores = scores - jnp.max(scores, axis=-1, keepdims=True)
    e = jnp.exp(scores)
    a = e * pl.reciprocal(jnp.sum(e, axis=-1, keepdims=True), approx=True)

    ctx = jnp.einsum("bqk,bku->bqu", a.astype(jnp.bfloat16), v_b,
                     preferred_element_type=jnp.float32)                # (Bb, S, U)
    ctx = ctx.reshape(Bb * S, U).astype(jnp.bfloat16)

    # --- output projection ---
    out = jnp.dot(ctx, wo_ref[...], preferred_element_type=jnp.float32) + bo_ref[...]

    # --- residual: GLU(q) = linear(q) * sigmoid(gate(q)); fused (U, 2F) matmul ---
    glu = jnp.dot(q.astype(jnp.bfloat16), wglu_ref[...],
                  preferred_element_type=jnp.float32) + bglu_ref[...]
    out = out + glu[:, :F] * jax.nn.sigmoid(glu[:, F:])

    # --- LayerNorm over the feature dim (eps matches nn.LayerNorm default) ---
    mean = jnp.mean(out, axis=-1, keepdims=True)
    centered = out - mean
    var = jnp.mean(centered * centered, axis=-1, keepdims=True)
    inv = jax.lax.rsqrt(var + 1e-5)
    normed = centered * inv * gamma_ref[...] + beta_ref[...]

    out_ref[...] = normed.reshape(Bb, S, F).astype(out_ref.dtype)


def _pick_block_b(B):
    """Largest divisor of B that still leaves >= 2 grid steps (v7x megacore)."""
    target = max(1, B // 2)
    for d in range(target, 0, -1):
        if B % d == 0:
            return d
    return 1


def _pack_params(params):
    """Fuse weights host-side; fold 1/sqrt(U) into the K projection; cast to bf16."""
    U = params["wq"].shape[1]
    scale = 1.0 / math.sqrt(float(U))
    wqkv = jnp.concatenate(
        [params["wq"], params["wk"] * scale, params["wv"]], axis=1
    ).astype(jnp.bfloat16)
    bqkv = jnp.concatenate(
        [params["bq"], params["bk"] * scale, params["bv"]], axis=1
    ).astype(jnp.float32)
    wglu = jnp.concatenate([params["wg"], params["wgate"]], axis=1).astype(jnp.bfloat16)
    bglu = jnp.concatenate([params["bg"], params["bgate"]], axis=1).astype(jnp.float32)
    return (
        wqkv, bqkv,
        params["wo"].astype(jnp.bfloat16), params["bo"].astype(jnp.float32),
        wglu, bglu,
        params["gamma"].astype(jnp.float32), params["beta"].astype(jnp.float32),
    )


def self_attention(x, params, *, block_b=None):
    """x: (B, S, F) float32. params: dict of weight arrays (see init_params)."""
    B, S, F = x.shape
    U = params["wq"].shape[1]
    if block_b is None:
        block_b = _pick_block_b(B)
    assert B % block_b == 0, "block_b must divide the batch dimension"

    wqkv, bqkv, wo, bo, wglu, bglu, gamma, beta = _pack_params(params)

    full = lambda shape: pl.BlockSpec(shape, lambda b: (0, 0))
    in_specs = [
        pl.BlockSpec((block_b, S, F), lambda b: (b, 0, 0)),   # x
        full((F, 3 * U)), full((1, 3 * U)),                    # wqkv, bqkv
        full((U, F)), full((1, F)),                            # wo, bo
        full((U, 2 * F)), full((1, 2 * F)),                    # wglu, bglu
        full((1, F)), full((1, F)),                            # gamma, beta
    ]

    return pl.pallas_call(
        self_attention_kernel,
        out_shape=jax.ShapeDtypeStruct((B, S, F), jnp.float32),
        grid_spec=pltpu.PrefetchScalarGridSpec(
            num_scalar_prefetch=0,
            grid=(B // block_b,),
            in_specs=in_specs,
            out_specs=pl.BlockSpec((block_b, S, F), lambda b: (b, 0, 0)),
        ),
        compiler_params=pltpu.CompilerParams(
            dimension_semantics=("parallel",),
            vmem_limit_bytes=64 * 1024 * 1024,
        ),
    )(
        x.astype(jnp.bfloat16),
        wqkv, bqkv, wo, bo, wglu, bglu, gamma, beta,
    )


def init_params(key, feature_dim, units=None):
    """Deterministic parameter init mirroring SelfAttention.build()."""
    units = feature_dim if units is None else units
    keys = jax.random.split(key, 12)

    def linear(kw, kb, fan_in, fan_out):
        bound = 1.0 / math.sqrt(fan_in)
        w = jax.random.uniform(kw, (fan_in, fan_out), jnp.float32, -bound, bound)
        b = jax.random.uniform(kb, (1, fan_out), jnp.float32, -bound, bound)
        return w, b

    wq, bq = linear(keys[0], keys[1], feature_dim, units)
    wk, bk = linear(keys[2], keys[3], feature_dim, units)
    wv, bv = linear(keys[4], keys[5], feature_dim, units)
    wo, bo = linear(keys[6], keys[7], units, feature_dim)
    wg, bg = linear(keys[8], keys[9], units, feature_dim)
    wgate, bgate = linear(keys[10], keys[11], units, feature_dim)
    gamma = jnp.ones((1, feature_dim), jnp.float32)
    beta = jnp.zeros((1, feature_dim), jnp.float32)
    return dict(
        wq=wq, bq=bq, wk=wk, bk=bk, wv=wv, bv=bv, wo=wo, bo=bo,
        wg=wg, bg=bg, wgate=wgate, bgate=bgate, gamma=gamma, beta=beta,
    )


def self_attention_reference(x, params):
    """Pure-JAX f32 reference matching the PyTorch forward (mask=None)."""
    q = x @ params["wq"] + params["bq"]
    k = x @ params["wk"] + params["bk"]
    v = x @ params["wv"] + params["bv"]
    scores = jnp.einsum("bqf,bkf->bqk", q, k) / math.sqrt(q.shape[-1])
    a = jax.nn.softmax(scores, axis=-1)
    out = jnp.einsum("bqk,bkf->bqf", a, v) @ params["wo"] + params["bo"]
    glu = (q @ params["wg"] + params["bg"]) * jax.nn.sigmoid(
        q @ params["wgate"] + params["bgate"])
    out = out + glu
    mean = out.mean(-1, keepdims=True)
    var = ((out - mean) ** 2).mean(-1, keepdims=True)
    return (out - mean) * jax.lax.rsqrt(var + 1e-5) * params["gamma"] + params["beta"]


if __name__ == "__main__":
    B, S, F = 2, 8, 32   # batch, seq, hidden
    key = jax.random.PRNGKey(0)
    kx, kp = jax.random.split(key)
    x = jax.random.normal(kx, (B, S, F), jnp.float32)
    params = init_params(kp, F)

    out = self_attention(x, params)
    jax.block_until_ready(out)
    assert out.shape == (B, S, F)

    # Sanity check vs f32 reference (loose tolerance: bf16 matmuls + approx recip).
    ref = self_attention_reference(x, params)
    assert bool(jnp.all(jnp.isfinite(out)))
    assert bool(jnp.allclose(out, ref, atol=2e-1, rtol=1e-1)), \
        f"max abs err {float(jnp.max(jnp.abs(out - ref)))}"

    print("KERNEL_OK")
</pallas_src>

<mosaic_0001>
module attributes {stable_mosaic.version = 11 : i64} {
  func.func @self_attention_kernel(%arg0: i32, %arg1: memref<1x8x32xbf16, #tpu.memory_space<vmem>>, %arg2: memref<32x96xbf16, #tpu.memory_space<vmem>>, %arg3: memref<1x96xf32, #tpu.memory_space<vmem>>, %arg4: memref<32x32xbf16, #tpu.memory_space<vmem>>, %arg5: memref<1x32xf32, #tpu.memory_space<vmem>>, %arg6: memref<32x64xbf16, #tpu.memory_space<vmem>>, %arg7: memref<1x64xf32, #tpu.memory_space<vmem>>, %arg8: memref<1x32xf32, #tpu.memory_space<vmem>>, %arg9: memref<1x32xf32, #tpu.memory_space<vmem>>, %arg10: memref<1x8x32xf32, #tpu.memory_space<vmem>>) attributes {dimension_semantics = [#tpu.dimension_semantics<parallel>], iteration_bounds = array<i64: 2>, scalar_prefetch = 0 : i64, scratch_operands = 0 : i64, tpu.core_type = #tpu.core_type<tc>, window_params = [{transform_indices = @transform_0, window_bounds = array<i64: 1, 8, 32>}, {pipeline_mode = #tpu.pipeline_mode<synchronous>, transform_indices = @transform_1, window_bounds = array<i64: 32, 96>}, {pipeline_mode = #tpu.pipeline_mode<synchronous>, transform_indices = @transform_2, window_bounds = array<i64: 1, 96>}, {pipeline_mode = #tpu.pipeline_mode<synchronous>, transform_indices = @transform_3, window_bounds = array<i64: 32, 32>}, {pipeline_mode = #tpu.pipeline_mode<synchronous>, transform_indices = @transform_4, window_bounds = array<i64: 1, 32>}, {pipeline_mode = #tpu.pipeline_mode<synchronous>, transform_indices = @transform_5, window_bounds = array<i64: 32, 64>}, {pipeline_mode = #tpu.pipeline_mode<synchronous>, transform_indices = @transform_6, window_bounds = array<i64: 1, 64>}, {pipeline_mode = #tpu.pipeline_mode<synchronous>, transform_indices = @transform_7, window_bounds = array<i64: 1, 32>}, {pipeline_mode = #tpu.pipeline_mode<synchronous>, transform_indices = @transform_8, window_bounds = array<i64: 1, 32>}, {transform_indices = @transform_9, window_bounds = array<i64: 1, 8, 32>}]} {
    %c0 = arith.constant 0 : index
    %c0_0 = arith.constant 0 : index
    %c0_1 = arith.constant 0 : index
    %0 = vector.load %arg1[%c0, %c0_0, %c0_1] : memref<1x8x32xbf16, #tpu.memory_space<vmem>>, vector<1x8x32xbf16>
    %1 = vector.shape_cast %0 : vector<1x8x32xbf16> to vector<8x32xbf16>
    %c0_2 = arith.constant 0 : index
    %c0_3 = arith.constant 0 : index
    %2 = vector.load %arg2[%c0_2, %c0_3] : memref<32x96xbf16, #tpu.memory_space<vmem>>, vector<32x96xbf16>
    %cst = arith.constant dense<0.000000e+00> : vector<8x96xf32>
    %3 = tpu.matmul %1, %2, %cst {dimension_numbers = #tpu.dot_dimension_numbers<[1], [0], [0], [1], [0, 0, 1, 1], [], []>} : vector<8x32xbf16>, vector<32x96xbf16>, vector<8x96xf32> -> vector<8x96xf32>
    %c0_4 = arith.constant 0 : index
    %c0_5 = arith.constant 0 : index
    %4 = vector.load %arg3[%c0_4, %c0_5] : memref<1x96xf32, #tpu.memory_space<vmem>>, vector<1x96xf32>
    %5 = vector.broadcast %4 : vector<1x96xf32> to vector<8x96xf32>
    %6 = arith.addf %3, %5 : vector<8x96xf32>
    %7 = vector.extract_strided_slice %6 {offsets = [0, 0], sizes = [8, 32], strides = [1, 1]} : vector<8x96xf32> to vector<8x32xf32>
    %8 = vector.extract_strided_slice %6 {offsets = [0, 32], sizes = [8, 32], strides = [1, 1]} : vector<8x96xf32> to vector<8x32xf32>
    %9 = vector.extract_strided_slice %6 {offsets = [0, 64], sizes = [8, 32], strides = [1, 1]} : vector<8x96xf32> to vector<8x32xf32>
    %10 = arith.truncf %7 : vector<8x32xf32> to vector<8x32xbf16>
    %11 = vector.shape_cast %10 : vector<8x32xbf16> to vector<1x8x32xbf16>
    %12 = arith.truncf %8 : vector<8x32xf32> to vector<8x32xbf16>
    %13 = vector.shape_cast %12 : vector<8x32xbf16> to vector<1x8x32xbf16>
    %14 = arith.truncf %9 : vector<8x32xf32> to vector<8x32xbf16>
    %15 = vector.shape_cast %14 : vector<8x32xbf16> to vector<1x8x32xbf16>
    "tpu.trace_start"() <{level = 10 : i32, message = "bqu,bku->bqk"}> : () -> ()
    %cst_6 = arith.constant dense<0.000000e+00> : vector<1x8x8xf32>
    %16 = tpu.matmul %11, %13, %cst_6 {dimension_numbers = #tpu.dot_dimension_numbers<[2], [2], [1], [1], [0, 0, 0, 1, 1, 1], [0], [0]>} : vector<1x8x32xbf16>, vector<1x8x32xbf16>, vector<1x8x8xf32> -> vector<1x8x8xf32>
    "tpu.trace_stop"() : () -> ()
    %cst_7 = arith.constant dense<0xFF800000> : vector<1x8xf32>
    %17 = vector.multi_reduction <maximumf>, %16, %cst_7 [2] : vector<1x8x8xf32> to vector<1x8xf32>
    %18 = vector.shape_cast %17 : vector<1x8xf32> to vector<1x8x1xf32>
    %19 = vector.broadcast %18 : vector<1x8x1xf32> to vector<1x8x8xf32>
    %20 = arith.subf %16, %19 : vector<1x8x8xf32>
    %21 = math.exp %20 : vector<1x8x8xf32>
    %cst_8 = arith.constant dense<0.000000e+00> : vector<1x8xf32>
    %22 = vector.multi_reduction <add>, %21, %cst_8 [2] : vector<1x8x8xf32> to vector<1x8xf32>
    %23 = vector.shape_cast %22 : vector<1x8xf32> to vector<1x8x1xf32>
    %24 = tpu.reciprocal %23 {approx = true} : vector<1x8x1xf32> -> vector<1x8x1xf32>
    %25 = vector.broadcast %24 : vector<1x8x1xf32> to vector<1x8x8xf32>
    %26 = arith.mulf %21, %25 : vector<1x8x8xf32>
    %27 = arith.truncf %26 : vector<1x8x8xf32> to vector<1x8x8xbf16>
    "tpu.trace_start"() <{level = 10 : i32, message = "bqk,bku->bqu"}> : () -> ()
    %cst_9 = arith.constant dense<0.000000e+00> : vector<1x8x32xf32>
    %28 = tpu.matmul %27, %15, %cst_9 {dimension_numbers = #tpu.dot_dimension_numbers<[2], [1], [1], [2], [0, 0, 0, 1, 1, 2], [0], [0]>} : vector<1x8x8xbf16>, vector<1x8x32xbf16>, vector<1x8x32xf32> -> vector<1x8x32xf32>
    "tpu.trace_stop"() : () -> ()
    %29 = vector.shape_cast %28 : vector<1x8x32xf32> to vector<8x32xf32>
    %30 = arith.truncf %29 : vector<8x32xf32> to vector<8x32xbf16>
    %c0_10 = arith.constant 0 : index
    %c0_11 = arith.constant 0 : index
    %31 = vector.load %arg4[%c0_10, %c0_11] : memref<32x32xbf16, #tpu.memory_space<vmem>>, vector<32x32xbf16>
    %cst_12 = arith.constant dense<0.000000e+00> : vector<8x32xf32>
    %32 = tpu.matmul %30, %31, %cst_12 {dimension_numbers = #tpu.dot_dimension_numbers<[1], [0], [0], [1], [0, 0, 1, 1], [], []>} : vector<8x32xbf16>, vector<32x32xbf16>, vector<8x32xf32> -> vector<8x32xf32>
    %c0_13 = arith.constant 0 : index
    %c0_14 = arith.constant 0 : index
    %33 = vector.load %arg5[%c0_13, %c0_14] : memref<1x32xf32, #tpu.memory_space<vmem>>, vector<1x32xf32>
    %34 = vector.broadcast %33 : vector<1x32xf32> to vector<8x32xf32>
    %35 = arith.addf %32, %34 : vector<8x32xf32>
    %36 = arith.truncf %7 : vector<8x32xf32> to vector<8x32xbf16>
    %c0_15 = arith.constant 0 : index
    %c0_16 = arith.constant 0 : index
    %37 = vector.load %arg6[%c0_15, %c0_16] : memref<32x64xbf16, #tpu.memory_space<vmem>>, vector<32x64xbf16>
    %cst_17 = arith.constant dense<0.000000e+00> : vector<8x64xf32>
    %38 = tpu.matmul %36, %37, %cst_17 {dimension_numbers = #tpu.dot_dimension_numbers<[1], [0], [0], [1], [0, 0, 1, 1], [], []>} : vector<8x32xbf16>, vector<32x64xbf16>, vector<8x64xf32> -> vector<8x64xf32>
    %c0_18 = arith.constant 0 : index
    %c0_19 = arith.constant 0 : index
    %39 = vector.load %arg7[%c0_18, %c0_19] : memref<1x64xf32, #tpu.memory_space<vmem>>, vector<1x64xf32>
    %40 = vector.broadcast %39 : vector<1x64xf32> to vector<8x64xf32>
    %41 = arith.addf %38, %40 : vector<8x64xf32>
    %42 = vector.extract_strided_slice %41 {offsets = [0, 0], sizes = [8, 32], strides = [1, 1]} : vector<8x64xf32> to vector<8x32xf32>
    %43 = vector.extract_strided_slice %41 {offsets = [0, 32], sizes = [8, 32], strides = [1, 1]} : vector<8x64xf32> to vector<8x32xf32>
    %44 = arith.negf %43 : vector<8x32xf32>
    %45 = math.exp %44 : vector<8x32xf32>
    %cst_20 = arith.constant 1.000000e+00 : f32
    %46 = vector.broadcast %cst_20 : f32 to vector<8x32xf32>
    %47 = arith.addf %46, %45 : vector<8x32xf32>
    %48 = arith.divf %46, %47 : vector<8x32xf32>
    %49 = arith.mulf %42, %48 : vector<8x32xf32>
    %50 = arith.addf %35, %49 : vector<8x32xf32>
    %cst_21 = arith.constant dense<0.000000e+00> : vector<8xf32>
    %51 = vector.multi_reduction <add>, %50, %cst_21 [1] : vector<8x32xf32> to vector<8xf32>
    %52 = vector.shape_cast %51 : vector<8xf32> to vector<8x1xf32>
    %cst_22 = arith.constant 3.200000e+01 : f32
    %53 = vector.broadcast %cst_22 : f32 to vector<8x1xf32>
    %54 = arith.divf %52, %53 : vector<8x1xf32>
    %55 = vector.broadcast %54 : vector<8x1xf32> to vector<8x32xf32>
    %56 = arith.subf %50, %55 : vector<8x32xf32>
    %57 = arith.mulf %56, %56 : vector<8x32xf32>
    %cst_23 = arith.constant dense<0.000000e+00> : vector<8xf32>
    %58 = vector.multi_reduction <add>, %57, %cst_23 [1] : vector<8x32xf32> to vector<8xf32>
    %59 = vector.shape_cast %58 : vector<8xf32> to vector<8x1xf32>
    %cst_24 = arith.constant 3.200000e+01 : f32
    %60 = vector.broadcast %cst_24 : f32 to vector<8x1xf32>
    %61 = arith.divf %59, %60 : vector<8x1xf32>
    %cst_25 = arith.constant 9.99999974E-6 : f32
    %62 = vector.broadcast %cst_25 : f32 to vector<8x1xf32>
    %63 = arith.addf %61, %62 : vector<8x1xf32>
    %64 = math.rsqrt %63 : vector<8x1xf32>
    %65 = vector.broadcast %64 : vector<8x1xf32> to vector<8x32xf32>
    %66 = arith.mulf %56, %65 : vector<8x32xf32>
    %c0_26 = arith.constant 0 : index
    %c0_27 = arith.constant 0 : index
    %67 = vector.load %arg8[%c0_26, %c0_27] : memref<1x32xf32, #tpu.memory_space<vmem>>, vector<1x32xf32>
    %68 = vector.broadcast %67 : vector<1x32xf32> to vector<8x32xf32>
    %69 = arith.mulf %66, %68 : vector<8x32xf32>
    %c0_28 = arith.constant 0 : index
    %c0_29 = arith.constant 0 : index
    %70 = vector.load %arg9[%c0_28, %c0_29] : memref<1x32xf32, #tpu.memory_space<vmem>>, vector<1x32xf32>
    %71 = vector.broadcast %70 : vector<1x32xf32> to vector<8x32xf32>
    %72 = arith.addf %69, %71 : vector<8x32xf32>
    %73 = vector.shape_cast %72 : vector<8x32xf32> to vector<1x8x32xf32>
    %c0_30 = arith.constant 0 : index
    %c0_31 = arith.constant 0 : index
    %c0_32 = arith.constant 0 : index
    %74 = vector.load %arg10[%c0_30, %c0_31, %c0_32] : memref<1x8x32xf32, #tpu.memory_space<vmem>>, vector<1x8x32xf32>
    tpu.vector_store %arg10[%c0_30, %c0_31, %c0_32], %73 {strides = array<i32>} : memref<1x8x32xf32, #tpu.memory_space<vmem>>, vector<1x8x32xf32>,
    return
  }
  func.func @transform_0(%arg0: i32) -> (i32, i32, i32) {
    %c0_i32 = arith.constant 0 : i32
    %c0_i32_0 = arith.constant 0 : i32
    %c0_i32_1 = arith.constant 0 : i32
    return %arg0, %c0_i32, %c0_i32_0 : i32, i32, i32
  }
  func.func @transform_1(%arg0: i32) -> (i32, i32) {
    %c0_i32 = arith.constant 0 : i32
    %c0_i32_0 = arith.constant 0 : i32
    %c0_i32_1 = arith.constant 0 : i32
    return %c0_i32, %c0_i32_0 : i32, i32
  }
  func.func @transform_2(%arg0: i32) -> (i32, i32) {
    %c0_i32 = arith.constant 0 : i32
    %c0_i32_0 = arith.constant 0 : i32
    %c0_i32_1 = arith.constant 0 : i32
    return %c0_i32, %c0_i32_0 : i32, i32
  }
  func.func @transform_3(%arg0: i32) -> (i32, i32) {
    %c0_i32 = arith.constant 0 : i32
    %c0_i32_0 = arith.constant 0 : i32
    %c0_i32_1 = arith.constant 0 : i32
    return %c0_i32, %c0_i32_0 : i32, i32
  }
  func.func @transform_4(%arg0: i32) -> (i32, i32) {
    %c0_i32 = arith.constant 0 : i32
    %c0_i32_0 = arith.constant 0 : i32
    %c0_i32_1 = arith.constant 0 : i32
    return %c0_i32, %c0_i32_0 : i32, i32
  }
  func.func @transform_5(%arg0: i32) -> (i32, i32) {
    %c0_i32 = arith.constant 0 : i32
    %c0_i32_0 = arith.constant 0 : i32
    %c0_i32_1 = arith.constant 0 : i32
    return %c0_i32, %c0_i32_0 : i32, i32
  }
  func.func @transform_6(%arg0: i32) -> (i32, i32) {
    %c0_i32 = arith.constant 0 : i32
    %c0_i32_0 = arith.constant 0 : i32
    %c0_i32_1 = arith.constant 0 : i32
    return %c0_i32, %c0_i32_0 : i32, i32
  }
  func.func @transform_7(%arg0: i32) -> (i32, i32) {
    %c0_i32 = arith.constant 0 : i32
    %c0_i32_0 = arith.constant 0 : i32
    %c0_i32_1 = arith.constant 0 : i32
    return %c0_i32, %c0_i32_0 : i32, i32
  }
  func.func @transform_8(%arg0: i32) -> (i32, i32) {
    %c0_i32 = arith.constant 0 : i32
    %c0_i32_0 = arith.constant 0 : i32
    %c0_i32_1 = arith.constant 0 : i32
    return %c0_i32, %c0_i32_0 : i32, i32
  }
  func.func @transform_9(%arg0: i32) -> (i32, i32, i32) {
    %c0_i32 = arith.constant 0 : i32
    %c0_i32_0 = arith.constant 0 : i32
    %c0_i32_1 = arith.constant 0 : i32
    return %arg0, %c0_i32, %c0_i32_0 : i32, i32, i32
  }
}

</mosaic_0001>

<llo_original>
// kernel: tpu_custom_call.1
$region0: #{tpu_custom_call.1}
  #allocation0 [shape = 'u32[]', space=smem, size = 0x4, offset = 0x4, fixed_abs, tag = 'smem constant byte address 0x4 - core index']
  #allocation1 [shape = 'u32[72,128]{1,0:T(1,128)}', space=vmem, size = 0x9000, scoped, tag = 'internal scratch']
  %s0 = inlined_call_operand.hbm [shape: bf16[2,8,32], index: 0, kind: input, shape index: {}]
  %s1 = inlined_call_operand.hbm [shape: bf16[32,96], index: 1, kind: input, shape index: {}]
  %s2 = inlined_call_operand.vmem [shape: f32[1,96], index: 2, kind: input, shape index: {}]
  %s3 = inlined_call_operand.hbm [shape: bf16[32,32], index: 3, kind: input, shape index: {}]
  %s4 = inlined_call_operand.vmem [shape: f32[1,32], index: 4, kind: input, shape index: {}]
  %s5 = inlined_call_operand.hbm [shape: bf16[32,64], index: 5, kind: input, shape index: {}]
  %s6 = inlined_call_operand.vmem [shape: f32[1,64], index: 6, kind: input, shape index: {}]
  %s7 = inlined_call_operand.vmem [shape: f32[1,32], index: 7, kind: input, shape index: {}]
  %s8 = inlined_call_operand.vmem [shape: f32[1,32], index: 8, kind: input, shape index: {}]
  %s9 = inlined_call_operand.hbm [shape: f32[2,8,32], index: 9, kind: output, shape index: {}]
  %s10 = sld [smem:[#allocation0]]
  $region85: #{tpu_custom_call.1} parent=0
    _
  %s12 = ssub.s32 1, %s10
  %s13 = scalar_select 0, %s12, %s10
  $region1: #{tpu_custom_call.1} parent=0
    #allocation2 [shape = 'u8[4096]{0}', space=vmem, size = 0x1000, scoped, tag = 'input window, operand 0']
    #allocation3 [shape = 's32[2]{0}', space=sflag, size = 0x8, scoped, tag = 'scoped memory for tpu_custom_call.1']
    #allocation4 [shape = 's32[2]{0}', space=sflag, size = 0x8, scoped, tag = 'scoped memory for tpu_custom_call.1']
    #allocation5 [shape = 'u8[8192]{0}', space=vmem, size = 0x2000, scoped, tag = 'input window, operand 1, single buffered']
    #allocation6 [shape = 's32[1]{0}', space=sflag, size = 0x4, scoped, tag = 'scoped memory for tpu_custom_call.1']
    #allocation7 [shape = 'u8[8192]{0}', space=vmem, size = 0x2000, scoped, tag = 'input window, operand 3, single buffered']
    #allocation8 [shape = 'u8[8192]{0}', space=vmem, size = 0x2000, scoped, tag = 'input window, operand 5, single buffered']
    #allocation9 [shape = 's32[1]{0}', space=sflag, size = 0x4, scoped, tag = 'scoped memory for tpu_custom_call.1']
    #allocation10 [shape = 'u8[8192]{0}', space=vmem, size = 0x2000, scoped, tag = 'output window, operand 0']
    %14 = vsyncpa [#allocation3], 0
    %s15 = scalar_lea.sflag [#allocation3], 1
    %16 = vsyncpa %s15, 0
    %17 = vsyncpa [#allocation6], 0
    %18 = vsyncpa [#allocation9], 0
    %19 = vsyncpa [#allocation4], 0
    %s20 = scalar_lea.sflag [#allocation4], 1
    %21 = vsyncpa %s20, 0
    loop: start=0, step=1, limit=4
    $region2: #{tpu_custom_call.1} parent=1 // loop_pre_header
      _
    $region3: #{tpu_custom_call.1} parent=1 // loop_header
      %s23 = sphi 0, %s27
      %p24 = scmp.ge.s32.totalorder %s23, 4
      %s33 = sphi 0, %s35
      %s36 = sphi 0, %s33
      %s37 = sphi 0, %s36
      %s53 = sphi 0, %s37
      %s57 = sphi 0, %s57
      %s59 = sphi 0, %s57
      %s60 = sphi 0, %s59
      %s74 = sphi 0, %s60
      %s78 = sphi 0, %s78
      %s80 = sphi 0, %s78
      %s81 = sphi 0, %s80
      %s95 = sphi 0, %s81
      %s99 = sphi 0, %s99
      %s101 = sphi 0, %s99
      %s102 = sphi 0, %s101
      %s116 = sphi 0, %s102
      %s120 = sphi 0, %s120
      %s122 = sphi 0, %s120
      %s123 = sphi 0, %s122
      %s137 = sphi 0, %s123
      %s141 = sphi 0, %s141
      %s143 = sphi 0, %s141
      %s144 = sphi 0, %s143
      %s158 = sphi 0, %s144
      %s162 = sphi 0, %s162
      %s164 = sphi 0, %s162
      %s165 = sphi 0, %s164
      %s179 = sphi 0, %s165
      %s183 = sphi 0, %s183
      %s185 = sphi 0, %s183
      %s186 = sphi 0, %s185
      %s200 = sphi 0, %s186
      %s204 = sphi 0, %s204
      %s206 = sphi 0, %s204
      %s207 = sphi 0, %s206
      %s221 = sphi 0, %s207
      %s227 = sphi 0, %s229
      %s230 = sphi 0, %s227
      %s231 = sphi 0, %s230
      %s247 = sphi 0, %s231
    $region4: #{tpu_custom_call.1} parent=1 // loop_header_branch
      %26 = sbr.rel (%p24) target = $region8
    $region5: #{tpu_custom_call.1} parent=1 // loop_body
      %s28 = ssub.s32 %s23, 1
      %s29 = ssub.s32 %s23, 2
      %s30 = sadd.s32 %s23, 1
      %s31 = ssub.s32 %s23, %s30
      %p32 = scmp.eq.s32.totalorder %s31, 0
      %s34 = sadd.s32 %s33, 1
      %s35 = scalar_select %p32, %s33, %s34
      %p38 = pneg %p32
      %p39 = scmp.eq.s32.totalorder %s23, 1
      %p40 = por %p38, %p39
      %p41 = scmp.ne.s32.totalorder %s33, %s36
      %p42 = scmp.eq.s32.totalorder %s23, 0
      %p43 = por %p41, %p42
      %p44 = scmp.ne.s32.totalorder %s33, %s36
      %p45 = scmp.eq.s32.totalorder %s28, 1
      %p46 = por %p44, %p45
      %p47 = scmp.ne.s32.totalorder %s36, %s37
      %p48 = scmp.eq.s32.totalorder %s28, 0
      %p49 = por %p47, %p48
      %p50 = scmp.ne.s32.totalorder %s36, %s37
      %p51 = scmp.eq.s32.totalorder %s29, 1
      %p52 = por %p50, %p51
      %p54 = scmp.ne.s32.totalorder %s37, %s53
      %p55 = scmp.eq.s32.totalorder %s29, 0
      %p56 = por %p54, %p55
      %s58 = sadd.s32 %s57, 1
      %p61 = scmp.eq.s32.totalorder %s23, 1
      %p62 = scmp.ne.s32.totalorder %s57, %s59
      %p63 = scmp.eq.s32.totalorder %s23, 0
      %p64 = por %p62, %p63
      %p65 = scmp.ne.s32.totalorder %s57, %s59
      %p66 = scmp.eq.s32.totalorder %s28, 1
      %p67 = por %p65, %p66
      %p68 = scmp.ne.s32.totalorder %s59, %s60
      %p69 = scmp.eq.s32.totalorder %s28, 0
      %p70 = por %p68, %p69
      %p71 = scmp.ne.s32.totalorder %s59, %s60
      %p72 = scmp.eq.s32.totalorder %s29, 1
      %p73 = por %p71, %p72
      %p75 = scmp.ne.s32.totalorder %s60, %s74
      %p76 = scmp.eq.s32.totalorder %s29, 0
      %p77 = por %p75, %p76
      %s79 = sadd.s32 %s78, 1
      %p82 = scmp.eq.s32.totalorder %s23, 1
      %p83 = scmp.ne.s32.totalorder %s78, %s80
      %p84 = scmp.eq.s32.totalorder %s23, 0
      %p85 = por %p83, %p84
      %p86 = scmp.ne.s32.totalorder %s78, %s80
      %p87 = scmp.eq.s32.totalorder %s28, 1
      %p88 = por %p86, %p87
      %p89 = scmp.ne.s32.totalorder %s80, %s81
      %p90 = scmp.eq.s32.totalorder %s28, 0
      %p91 = por %p89, %p90
      %p92 = scmp.ne.s32.totalorder %s80, %s81
      %p93 = scmp.eq.s32.totalorder %s29, 1
      %p94 = por %p92, %p93
      %p96 = scmp.ne.s32.totalorder %s81, %s95
      %p97 = scmp.eq.s32.totalorder %s29, 0
      %p98 = por %p96, %p97
      %s100 = sadd.s32 %s99, 1
      %p103 = scmp.eq.s32.totalorder %s23, 1
      %p104 = scmp.ne.s32.totalorder %s99, %s101
      %p105 = scmp.eq.s32.totalorder %s23, 0
      %p106 = por %p104, %p105
      %p107 = scmp.ne.s32.totalorder %s99, %s101
      %p108 = scmp.eq.s32.totalorder %s28, 1
      %p109 = por %p107, %p108
      %p110 = scmp.ne.s32.totalorder %s101, %s102
      %p111 = scmp.eq.s32.totalorder %s28, 0
      %p112 = por %p110, %p111
      %p113 = scmp.ne.s32.totalorder %s101, %s102
      %p114 = scmp.eq.s32.totalorder %s29, 1
      %p115 = por %p113, %p114
      %p117 = scmp.ne.s32.totalorder %s102, %s116
      %p118 = scmp.eq.s32.totalorder %s29, 0
      %p119 = por %p117, %p118
      %s121 = sadd.s32 %s120, 1
      %p124 = scmp.eq.s32.totalorder %s23, 1
      %p125 = scmp.ne.s32.totalorder %s120, %s122
      %p126 = scmp.eq.s32.totalorder %s23, 0
      %p127 = por %p125, %p126
      %p128 = scmp.ne.s32.totalorder %s120, %s122
      %p129 = scmp.eq.s32.totalorder %s28, 1
      %p130 = por %p128, %p129
      %p131 = scmp.ne.s32.totalorder %s122, %s123
      %p132 = scmp.eq.s32.totalorder %s28, 0
      %p133 = por %p131, %p132
      %p134 = scmp.ne.s32.totalorder %s122, %s123
      %p135 = scmp.eq.s32.totalorder %s29, 1
      %p136 = por %p134, %p135
      %p138 = scmp.ne.s32.totalorder %s123, %s137
      %p139 = scmp.eq.s32.totalorder %s29, 0
      %p140 = por %p138, %p139
      %s142 = sadd.s32 %s141, 1
      %p145 = scmp.eq.s32.totalorder %s23, 1
      %p146 = scmp.ne.s32.totalorder %s141, %s143
      %p147 = scmp.eq.s32.totalorder %s23, 0
      %p148 = por %p146, %p147
      %p149 = scmp.ne.s32.totalorder %s141, %s143
      %p150 = scmp.eq.s32.totalorder %s28, 1
      %p151 = por %p149, %p150
      %p152 = scmp.ne.s32.totalorder %s143, %s144
      %p153 = scmp.eq.s32.totalorder %s28, 0
      %p154 = por %p152, %p153
      %p155 = scmp.ne.s32.totalorder %s143, %s144
      %p156 = scmp.eq.s32.totalorder %s29, 1
      %p157 = por %p155, %p156
      %p159 = scmp.ne.s32.totalorder %s144, %s158
      %p160 = scmp.eq.s32.totalorder %s29, 0
      %p161 = por %p159, %p160
      %s163 = sadd.s32 %s162, 1
      %p166 = scmp.eq.s32.totalorder %s23, 1
      %p167 = scmp.ne.s32.totalorder %s162, %s164
      %p168 = scmp.eq.s32.totalorder %s23, 0
      %p169 = por %p167, %p168
      %p170 = scmp.ne.s32.totalorder %s162, %s164
      %p171 = scmp.eq.s32.totalorder %s28, 1
      %p172 = por %p170, %p171
      %p173 = scmp.ne.s32.totalorder %s164, %s165
      %p174 = scmp.eq.s32.totalorder %s28, 0
      %p175 = por %p173, %p174
      %p176 = scmp.ne.s32.totalorder %s164, %s165
      %p177 = scmp.eq.s32.totalorder %s29, 1
      %p178 = por %p176, %p177
      %p180 = scmp.ne.s32.totalorder %s165, %s179
      %p181 = scmp.eq.s32.totalorder %s29, 0
      %p182 = por %p180, %p181
      %s184 = sadd.s32 %s183, 1
      %p187 = scmp.eq.s32.totalorder %s23, 1
      %p188 = scmp.ne.s32.totalorder %s183, %s185
      %p189 = scmp.eq.s32.totalorder %s23, 0
      %p190 = por %p188, %p189
      %p191 = scmp.ne.s32.totalorder %s183, %s185
      %p192 = scmp.eq.s32.totalorder %s28, 1
      %p193 = por %p191, %p192
      %p194 = scmp.ne.s32.totalorder %s185, %s186
      %p195 = scmp.eq.s32.totalorder %s28, 0
      %p196 = por %p194, %p195
      %p197 = scmp.ne.s32.totalorder %s185, %s186
      %p198 = scmp.eq.s32.totalorder %s29, 1
      %p199 = por %p197, %p198
      %p201 = scmp.ne.s32.totalorder %s186, %s200
      %p202 = scmp.eq.s32.totalorder %s29, 0
      %p203 = por %p201, %p202
      %s205 = sadd.s32 %s204, 1
      %p208 = scmp.eq.s32.totalorder %s23, 1
      %p209 = scmp.ne.s32.totalorder %s204, %s206
      %p210 = scmp.eq.s32.totalorder %s23, 0
      %p211 = por %p209, %p210
      %p212 = scmp.ne.s32.totalorder %s204, %s206
      %p213 = scmp.eq.s32.totalorder %s28, 1
      %p214 = por %p212, %p213
      %p215 = scmp.ne.s32.totalorder %s206, %s207
      %p216 = scmp.eq.s32.totalorder %s28, 0
      %p217 = por %p215, %p216
      %p218 = scmp.ne.s32.totalorder %s206, %s207
      %p219 = scmp.eq.s32.totalorder %s29, 1
      %p220 = por %p218, %p219
      %p222 = scmp.ne.s32.totalorder %s207, %s221
      %p223 = scmp.eq.s32.totalorder %s29, 0
      %p224 = por %p222, %p223
      %s225 = ssub.s32 %s23, %s30
      %p226 = scmp.eq.s32.totalorder %s225, 0
      %s228 = sadd.s32 %s227, 1
      %s229 = scalar_select %p226, %s227, %s228
      %p232 = pneg %p226
      %p233 = scmp.eq.s32.totalorder %s23, 1
      %p234 = por %p232, %p233
      %p235 = scmp.ne.s32.totalorder %s227, %s230
      %p236 = scmp.eq.s32.totalorder %s23, 0
      %p237 = por %p235, %p236
      %p238 = scmp.ne.s32.totalorder %s227, %s230
      %p239 = scmp.eq.s32.totalorder %s28, 1
      %p240 = por %p238, %p239
      %p241 = scmp.ne.s32.totalorder %s230, %s231
      %p242 = scmp.eq.s32.totalorder %s28, 0
      %p243 = por %p241, %p242
      %p244 = scmp.ne.s32.totalorder %s230, %s231
      %p245 = scmp.eq.s32.totalorder %s29, 1
      %p246 = por %p244, %p245
      %p248 = scmp.ne.s32.totalorder %s231, %s247
      %p249 = scmp.eq.s32.totalorder %s29, 0
      %p250 = por %p248, %p249
      %p251 = scmp.le.s32.totalorder 1, %s23
      %p252 = scmp.lt.s32.totalorder %s23, 3
      %p253 = pnand %p251, %p252
      %p254 = pneg %p253
      // Predicated region
      $region9: #{tpu_custom_call.1} parent=5 // pred_check
        _
      $region10: #{tpu_custom_call.1} parent=5 // pred_check_branch
        %256 = sbr.rel (%p253) target = $region12
      $region11: #{tpu_custom_call.1} parent=5 // pred_region
        %s257 = ssub.s32 %s23, 1
        // Predicated region
        $region13: #{tpu_custom_call.1} parent=11 // pred_check
          %p258 = pneg %p70
        $region14: #{tpu_custom_call.1} parent=11 // pred_check_branch
          %260 = sbr.rel (%p258) target = $region16
        $region15: #{tpu_custom_call.1} parent=11 // pred_region
          %262 = vsyncadd [#allocation6], 0
          %s263 = sshll.u32 %s1, 4
          %s264 = int_to_ptr.hbm [resolvable:$true] %s263
          %s265 = sshll.u32 [#allocation5], 4
          %s266 = int_to_ptr.vmem [resolvable:$true] %s265
          %271 = dma.hbm_to_vmem [thread:$0]  %s264, 256, %s266, [#allocation6], 64, 64, 4
        $region16: #{tpu_custom_call.1} parent=11 // pred_fallthru
          _
        // Predicated region
        $region17: #{tpu_custom_call.1} parent=11 // pred_check
          %p272 = pneg %p91
        $region18: #{tpu_custom_call.1} parent=11 // pred_check_branch
          %274 = sbr.rel (%p272) target = $region20
        $region19: #{tpu_custom_call.1} parent=11 // pred_region
          _
        $region20: #{tpu_custom_call.1} parent=11 // pred_fallthru
          _
        // Predicated region
        $region21: #{tpu_custom_call.1} parent=11 // pred_check
          %p275 = pneg %p112
        $region22: #{tpu_custom_call.1} parent=11 // pred_check_branch
          %277 = sbr.rel (%p275) target = $region24
        $region23: #{tpu_custom_call.1} parent=11 // pred_region
          %279 = vsyncadd [#allocation6], 0
          %s280 = sshll.u32 %s3, 4
          %s281 = int_to_ptr.hbm [resolvable:$true] %s280
          %s282 = sshll.u32 [#allocation7], 4
          %s283 = int_to_ptr.vmem [resolvable:$true] %s282
          %288 = dma.hbm_to_vmem [thread:$0]  %s281, 256, %s283, [#allocation6], 64, 64, 4
        $region24: #{tpu_custom_call.1} parent=11 // pred_fallthru
          _
        // Predicated region
        $region25: #{tpu_custom_call.1} parent=11 // pred_check
          %p289 = pneg %p133
        $region26: #{tpu_custom_call.1} parent=11 // pred_check_branch
          %291 = sbr.rel (%p289) target = $region28
        $region27: #{tpu_custom_call.1} parent=11 // pred_region
          _
        $region28: #{tpu_custom_call.1} parent=11 // pred_fallthru
          _
        // Predicated region
        $region29: #{tpu_custom_call.1} parent=11 // pred_check
          %p292 = pneg %p154
        $region30: #{tpu_custom_call.1} parent=11 // pred_check_branch
          %294 = sbr.rel (%p292) target = $region32
        $region31: #{tpu_custom_call.1} parent=11 // pred_region
          %296 = vsyncadd [#allocation9], 0
          %s297 = sshll.u32 %s5, 4
          %s298 = int_to_ptr.hbm [resolvable:$true] %s297
          %s299 = sshll.u32 [#allocation8], 4
          %s300 = int_to_ptr.vmem [resolvable:$true] %s299
          %305 = dma.hbm_to_vmem [thread:$0]  %s298, 256, %s300, [#allocation9], 64, 64, 4
        $region32: #{tpu_custom_call.1} parent=11 // pred_fallthru
          _
        // Predicated region
        $region33: #{tpu_custom_call.1} parent=11 // pred_check
          %p306 = pneg %p175
        $region34: #{tpu_custom_call.1} parent=11 // pred_check_branch
          %308 = sbr.rel (%p306) target = $region36
        $region35: #{tpu_custom_call.1} parent=11 // pred_region
          _
        $region36: #{tpu_custom_call.1} parent=11 // pred_fallthru
          _
        // Predicated region
        $region37: #{tpu_custom_call.1} parent=11 // pred_check
          %p309 = pneg %p196
        $region38: #{tpu_custom_call.1} parent=11 // pred_check_branch
          %311 = sbr.rel (%p309) target = $region40
        $region39: #{tpu_custom_call.1} parent=11 // pred_region
          _
        $region40: #{tpu_custom_call.1} parent=11 // pred_fallthru
          _
        // Predicated region
        $region41: #{tpu_custom_call.1} parent=11 // pred_check
          %p312 = pneg %p217
        $region42: #{tpu_custom_call.1} parent=11 // pred_check_branch
          %314 = sbr.rel (%p312) target = $region44
        $region43: #{tpu_custom_call.1} parent=11 // pred_region
          _
        $region44: #{tpu_custom_call.1} parent=11 // pred_fallthru
          _
      $region12: #{tpu_custom_call.1} parent=5 // pred_fallthru
        _
      %p315 = scmp.lt.s32.totalorder %s23, 2
      // Predicated region
      $region45: #{tpu_custom_call.1} parent=5 // pred_check
        %p316 = pneg %p315
      $region46: #{tpu_custom_call.1} parent=5 // pred_check_branch
        %318 = sbr.rel (%p316) target = $region48
      $region47: #{tpu_custom_call.1} parent=5 // pred_region
        // Predicated region
        $region49: #{tpu_custom_call.1} parent=47 // pred_check
          %p319 = pneg %p43
        $region50: #{tpu_custom_call.1} parent=47 // pred_check_branch
          %321 = sbr.rel (%p319) target = $region52
        $region51: #{tpu_custom_call.1} parent=47 // pred_region
          %s322 = sand.u32 %s33, 1
          %s323 = scalar_lea.sflag [#allocation3], %s322
          %s324 = sand.u32 %s33, 1
          %s325 = smul.addr %s324, 4
          %s326 = scalar_lea.vmem [#allocation2], %s325
          %328 = vsyncadd %s323, 0
          %s329 = smul.addr %s23, 4
          %s330 = scalar_lea.hbm %s0, %s329
          %s332 = sshll.u32 %s330, 4
          %s333 = int_to_ptr.hbm [resolvable:$true] %s332
          %s334 = sshll.u32 %s326, 4
          %s335 = int_to_ptr.vmem [resolvable:$true] %s334
          %337 = dma.hbm_to_vmem [thread:$0]  %s333, 64, %s335, %s323
        $region52: #{tpu_custom_call.1} parent=47 // pred_fallthru
          _
      $region48: #{tpu_custom_call.1} parent=5 // pred_fallthru
        _
      %p338 = scmp.le.s32.totalorder 1, %s23
      %p339 = scmp.lt.s32.totalorder %s23, 3
      %p340 = pnand %p338, %p339
      %p341 = pneg %p340
      // Predicated region
      $region53: #{tpu_custom_call.1} parent=5 // pred_check
        _
      $region54: #{tpu_custom_call.1} parent=5 // pred_check_branch
        %343 = sbr.rel (%p340) target = $region56
      $region55: #{tpu_custom_call.1} parent=5 // pred_region
        %s344 = ssub.s32 %s23, 1
        %s345 = sand.u32 %s36, 1
        %s346 = scalar_lea.sflag [#allocation3], %s345
        %s347 = sand.u32 %s36, 1
        %s348 = smul.addr %s347, 4
        %s349 = scalar_lea.vmem [#allocation2], %s348
        // Predicated region
        $region57: #{tpu_custom_call.1} parent=55 // pred_check
          %p350 = pneg %p49
        $region58: #{tpu_custom_call.1} parent=55 // pred_check_branch
          %352 = sbr.rel (%p350) target = $region60
        $region59: #{tpu_custom_call.1} parent=55 // pred_region
          %354 = dma.done %s346, 64
        $region60: #{tpu_custom_call.1} parent=55 // pred_fallthru
          _
        // Predicated region
        $region61: #{tpu_custom_call.1} parent=55 // pred_check
          %p355 = pneg %p70
        $region62: #{tpu_custom_call.1} parent=55 // pred_check_branch
          %357 = sbr.rel (%p355) target = $region64
        $region63: #{tpu_custom_call.1} parent=55 // pred_region
          %359 = dma.done [#allocation6], 256
        $region64: #{tpu_custom_call.1} parent=55 // pred_fallthru
          _
        // Predicated region
        $region65: #{tpu_custom_call.1} parent=55 // pred_check
          %p360 = pneg %p112
        $region66: #{tpu_custom_call.1} parent=55 // pred_check_branch
          %362 = sbr.rel (%p360) target = $region68
        $region67: #{tpu_custom_call.1} parent=55 // pred_region
          %364 = dma.done [#allocation6], 256
        $region68: #{tpu_custom_call.1} parent=55 // pred_fallthru
          _
        // Predicated region
        $region69: #{tpu_custom_call.1} parent=55 // pred_check
          %p365 = pneg %p154
        $region70: #{tpu_custom_call.1} parent=55 // pred_check_branch
          %367 = sbr.rel (%p365) target = $region72
        $region71: #{tpu_custom_call.1} parent=55 // pred_region
          %369 = dma.done [#allocation9], 256
        $region72: #{tpu_custom_call.1} parent=55 // pred_fallthru
          _
        %s370 = sand.u32 %s36, 1
        %s371 = scalar_lea.sflag [#allocation3], %s370
        %s372 = sand.u32 %s36, 1
        %s373 = smul.addr %s372, 4
        %s374 = scalar_lea.vmem [#allocation2], %s373
        %p375 = pneg %p49
        %p376 = pneg %p46
        %p377 = pneg %p70
        %p378 = pneg %p67
        %p379 = pneg %p91
        %p380 = pneg %p88
        %p381 = pneg %p112
        %p382 = pneg %p109
        %p383 = pneg %p133
        %p384 = pneg %p130
        %p385 = pneg %p154
        %p386 = pneg %p151
        %p387 = pneg %p175
        %p388 = pneg %p172
        %p389 = pneg %p196
        %p390 = pneg %p193
        %p391 = pneg %p217
        %p392 = pneg %p214
        %p393 = pneg %p243
        %p394 = pneg %p240
        %s395 = sand.u32 %s230, 1
        %s396 = scalar_lea.sflag [#allocation4], %s395
        %s397 = sand.u32 %s230, 1
        %s398 = smul.addr %s397, 8
        %s399 = scalar_lea.vmem [#allocation10], %s398
        %v401 = vld [vmem:[%s349] sm:$0xf]
        %v402 = vld [vmem:[#allocation5] sm:$0xf]
        %v403 = vld [vmem:[#allocation5 + $0x4] sm:$0xf]
        %v404 = vld [vmem:[#allocation5 + $0x8] sm:$0xf]
        %v405 = vld [vmem:[#allocation5 + $0xc] sm:$0xf]
        %v406 = vld [vmem:[%s2] sm:$0x1]
        %v408 = vperm.slane %v406, 0
        %v414 = vunpack.c.l.b16 %v402
        %v415 = vunpack.c.l.b16 %v403
        %v416 = vunpack.c.l.b16 %v404
        %v417 = vunpack.c.l.b16 %v405
        %v418 = vpack.c.b16 %v415, %v414
        %v419 = vpack.c.b16 %v417, %v416
        %vm422 = vcmask 261120
        %v424 = vsel %vm422, %v401, 0
        %426 = vmatpush.bf16.msra.mxu0 0
        %427 = vmatpush.bf16.msra.mxu0 0
        %428 = vmatpush.bf16.msra.mxu0 0
        %429 = vmatpush.bf16.msra.mxu0 0
        %430 = vmatpush.bf16.msra.mxu0 0
        %431 = vmatpush.bf16.msra.mxu0 0
        %432 = vmatpush.bf16.msra.mxu0 %v419
        %433 = vmatpush.bf16.msra.mxu0 %v418
        %434 = vmatmul.bf16.gmra.mxu0 %v424
        %v435 = vpop.f32.mrf.mxu0
        %v436 = vadd.f32 %v408, %v435
        %v437 = vpop.f32.mrf.mxu0
        %438 = vdwg.mxu0
        %v439 = vpack.c.bf16 %v436, %v436
        %v441 = vunpack.c.l.b16 %v439
        %v442 = vpack.c.b16 %v441, %v441
        %443 = vrot.lane.b32.xlu0 %v442, 96
        %v444 = vpop.permute.xlu0 %443
        %v446 = vsel %vm422, %v439, 0
        %v449 = vsel %vm422, %v444, 0
        %451 = vmatpush.bf16.xpose.msra.mxu0 0
        %452 = vmatpush.bf16.xpose.msra.mxu0 0
        %453 = vmatpush.bf16.xpose.msra.mxu0 0
        %454 = vmatpush.bf16.xpose.msra.mxu0 0
        %455 = vmatpush.bf16.xpose.msra.mxu0 0
        %456 = vmatpush.bf16.xpose.msra.mxu0 0
        %457 = vmatpush.bf16.xpose.msra.mxu0 0
        %458 = vmatpush.bf16.xpose.msra.mxu0 %v449
        %459 = vmatmul.bf16.gmra.mxu0 %v446
        %v460 = vpop.f32.mrf.mxu0
        %v461 = vadd.f32 0.0, %v460
        %v462 = vpop.f32.mrf.mxu0
        %463 = vdwg.mxu0
        %vm464 = vcmask 64512
        %v465 = vsel %vm464, %v461, -inf
        %466 = vmax.xlane.f32.xlu0 %v465
        %v467 = vpop.xlane.xlu0 %466
        %v468 = vsub.f32 %v461, %v467
        %v469 = vmul.f32 %v468, 1.442695
        %v470 = vpow.pop %v469
        %v471 = vsel %vm464, %v470, 0.0
        %472 = vadd.xlane.f32.xlu0 %v471
        %v473 = vpop.xlane.xlu0 %472
        %v474 = vrcp.pop %v473
        %v475 = vmul.f32 %v470, %v474
        %v476 = vpack.c.bf16 %v475, %v475
        %477 = vrot.lane.b32.xlu0 %v442, 64
        %v478 = vpop.permute.xlu0 %477
        %v480 = vsel %vm464, %v476, 0
        %vm482 = vcmask 1043456
        %v484 = vsel %vm482, %v478, 0
        %486 = vmatpush.bf16.msra.mxu0 0
        %487 = vmatpush.bf16.msra.mxu0 0
        %488 = vmatpush.bf16.msra.mxu0 0
        %489 = vmatpush.bf16.msra.mxu0 0
        %490 = vmatpush.bf16.msra.mxu0 0
        %491 = vmatpush.bf16.msra.mxu0 0
        %492 = vmatpush.bf16.msra.mxu0 0
        %493 = vmatpush.bf16.msra.mxu0 %v484
        %494 = vmatmul.bf16.gmra.mxu0 %v480
        %v495 = vpop.f32.mrf.mxu0
        %v496 = vadd.f32 0.0, %v495
        %v497 = vpop.f32.mrf.mxu0
        %498 = vdwg.mxu0
        %v499 = vpack.c.bf16 %v496, %v496
        %v500 = vld [vmem:[#allocation7] sm:$0xf]
        %v501 = vld [vmem:[#allocation7 + $0x4] sm:$0xf]
        %v502 = vld [vmem:[#allocation7 + $0x8] sm:$0xf]
        %v503 = vld [vmem:[#allocation7 + $0xc] sm:$0xf]
        %v504 = vld [vmem:[%s4] sm:$0x1]
        %v506 = vperm.slane %v504, 0
        %v512 = vunpack.c.l.b16 %v500
        %v513 = vunpack.c.l.b16 %v501
        %v514 = vunpack.c.l.b16 %v502
        %v515 = vunpack.c.l.b16 %v503
        %v516 = vpack.c.b16 %v513, %v512
        %v517 = vpack.c.b16 %v515, %v514
        %v521 = vsel %vm422, %v499, 0
        %523 = vmatpush.bf16.msra.mxu0 0
        %524 = vmatpush.bf16.msra.mxu0 0
        %525 = vmatpush.bf16.msra.mxu0 0
        %526 = vmatpush.bf16.msra.mxu0 0
        %527 = vmatpush.bf16.msra.mxu0 0
        %528 = vmatpush.bf16.msra.mxu0 0
        %529 = vmatpush.bf16.msra.mxu0 %v517
        %530 = vmatpush.bf16.msra.mxu0 %v516
        %531 = vmatmul.bf16.gmra.mxu0 %v521
        %v532 = vpop.f32.mrf.mxu0
        %v533 = vadd.f32 %v506, %v532
        %v534 = vpop.f32.mrf.mxu0
        %535 = vdwg.mxu0
        %v536 = vld [vmem:[#allocation8] sm:$0xf]
        %v537 = vld [vmem:[#allocation8 + $0x4] sm:$0xf]
        %v538 = vld [vmem:[#allocation8 + $0x8] sm:$0xf]
        %v539 = vld [vmem:[#allocation8 + $0xc] sm:$0xf]
        %v540 = vld [vmem:[%s6] sm:$0x1]
        %v542 = vperm.slane %v540, 0
        %v548 = vunpack.c.l.b16 %v536
        %v549 = vunpack.c.l.b16 %v537
        %v550 = vunpack.c.l.b16 %v538
        %v551 = vunpack.c.l.b16 %v539
        %v552 = vpack.c.b16 %v549, %v548
        %v553 = vpack.c.b16 %v551, %v550
        %556 = vmatpush.bf16.msra.mxu0 0
        %557 = vmatpush.bf16.msra.mxu0 0
        %558 = vmatpush.bf16.msra.mxu0 0
        %559 = vmatpush.bf16.msra.mxu0 0
        %560 = vmatpush.bf16.msra.mxu0 0
        %561 = vmatpush.bf16.msra.mxu0 0
        %562 = vmatpush.bf16.msra.mxu0 %v553
        %563 = vmatpush.bf16.msra.mxu0 %v552
        %564 = vmatmul.bf16.gmra.mxu0 %v446
        %v565 = vpop.f32.mrf.mxu0
        %v566 = vadd.f32 %v542, %v565
        %v567 = vpop.f32.mrf.mxu0
        %568 = vdwg.mxu0
        %v569 = vxor.u32 %v566, 2147483648
        %v570 = vmul.f32 %v569, 1.442695
        %v571 = vpow.pop %v570
        %v572 = vadd.f32 %v571, 1.0
        %v573 = vrcp.pop %v572
        %v574 = vmul.f32 %v572, %v573
        %v575 = vsub.f32 1.0, %v574
        %v576 = vmul.f32 %v573, %v575
        %v577 = vadd.f32 %v573, %v576
        %vm578 = vweird.f32 %v572
        %vm579 = vweird.f32 %v573
        %vm580 = vmor %vm578, %vm579
        %v581 = vsel %vm580, %v573, %v577
        %v582 = vand.u32 2147483647, %v572
        %vm583 = vcmp.eq.f32.partialorder %v582, 8.507059e+37
        %v584 = vand.u32 %v572, 2147483648
        %v585 = vor.u32 1.1754944e-38, %v584
        %v586 = vsel %vm583, %v585, %v581
        %v587 = vmul.f32 1.0, %v586
        %589 = vrot.lane.b32.xlu0 %v587, 96
        %v590 = vpop.permute.xlu0 %589
        %v592 = vmul.f32 %v566, %v590
        %v593 = vadd.f32 %v533, %v592
        %v594 = vsel %vm422, %v593, 0.0
        %595 = vadd.xlane.f32.xlu0 %v594
        %v596 = vpop.xlane.xlu0 %595
        %v597 = vrcp.pop 32.0
        %v598 = vmul.f32 32.0, %v597
        %v599 = vsub.f32 1.0, %v598
        %v600 = vmul.f32 %v597, %v599
        %v601 = vadd.f32 %v597, %v600
        %vm602 = vweird.f32 %v597
        %v603 = vsel %vm602, %v597, %v601
        %v604 = vmul.f32 %v596, %v603
        %v605 = vsub.f32 %v593, %v604
        %v606 = vmul.f32 %v605, %v605
        %v607 = vsel %vm422, %v606, 0.0
        %608 = vadd.xlane.f32.xlu0 %v607
        %v609 = vpop.xlane.xlu0 %608
        %v610 = vmul.f32 %v609, %v603
        %v611 = vadd.f32 %v610, 1e-05
        %v612 = vrsqrt.pop %v611
        %v613 = vmul.f32 %v612, %v611
        %v614 = vmul.f32 %v613, %v612
        %v615 = vmul.f32 0.5, %v614
        %v616 = vsub.f32 1.5, %v615
        %v617 = vmul.f32 %v612, %v616
        %vm618 = vweird.f32 %v611
        %vm619 = vweird.f32 %v612
        %vm620 = vmor %vm618, %vm619
        %v621 = vsel %vm620, %v612, %v617
        %v622 = vmul.f32 %v605, %v621
        %v623 = vld [vmem:[%s7] sm:$0x1]
        %v625 = vperm.slane %v623, 0
        %v627 = vmul.f32 %v622, %v625
        %v628 = vld [vmem:[%s8] sm:$0x1]
        %v630 = vperm.slane %v628, 0
        %v632 = vadd.f32 %v627, %v630
        %633 = vst.msk [vmem:[%s399] sm:$0xff] %vm422, %v632
        %s634 = sand.u32 %s230, 1
        %s635 = scalar_lea.sflag [#allocation4], %s634
        %s636 = sand.u32 %s230, 1
        %s637 = smul.addr %s636, 8
        %s638 = scalar_lea.vmem [#allocation10], %s637
        // Predicated region
        $region73: #{tpu_custom_call.1} parent=55 // pred_check
          %p639 = pneg %p240
        $region74: #{tpu_custom_call.1} parent=55 // pred_check_branch
          %641 = sbr.rel (%p639) target = $region76
        $region75: #{tpu_custom_call.1} parent=55 // pred_region
          %643 = vsyncadd %s635, 0
          %s644 = smul.addr %s28, 8
          %s645 = scalar_lea.hbm %s9, %s644
          %s647 = sshll.u32 %s638, 4
          %s648 = int_to_ptr.vmem [resolvable:$true] %s647
          %s649 = sshll.u32 %s645, 4
          %s650 = int_to_ptr.hbm [resolvable:$true] %s649
          %652 = dma.vmem_to_hbm [thread:$0]  %s648, 128, %s650, %s635
        $region76: #{tpu_custom_call.1} parent=55 // pred_fallthru
          _
      $region56: #{tpu_custom_call.1} parent=5 // pred_fallthru
        _
      %p653 = scmp.le.s32.totalorder 2, %s23
      // Predicated region
      $region77: #{tpu_custom_call.1} parent=5 // pred_check
        %p654 = pneg %p653
      $region78: #{tpu_custom_call.1} parent=5 // pred_check_branch
        %656 = sbr.rel (%p654) target = $region80
      $region79: #{tpu_custom_call.1} parent=5 // pred_region
        %s657 = ssub.s32 %s23, 2
        // Predicated region
        $region81: #{tpu_custom_call.1} parent=79 // pred_check
          %p658 = pneg %p246
        $region82: #{tpu_custom_call.1} parent=79 // pred_check_branch
          %660 = sbr.rel (%p658) target = $region84
        $region83: #{tpu_custom_call.1} parent=79 // pred_region
          %s661 = sand.u32 %s231, 1
          %s662 = scalar_lea.sflag [#allocation4], %s661
          %s663 = sand.u32 %s231, 1
          %s664 = smul.addr %s663, 8
          %s665 = scalar_lea.vmem [#allocation10], %s664
          %667 = dma.done %s662, 128
        $region84: #{tpu_custom_call.1} parent=79 // pred_fallthru
          _
      $region80: #{tpu_custom_call.1} parent=5 // pred_fallthru
        _
    $region6: #{tpu_custom_call.1} parent=1 // loop_footer
      %s27 = sadd.s32 1, %s23
    $region7: #{tpu_custom_call.1} parent=1 // loop_footer_branch
      %22 = sbr.rel target = $region3
    $region8: #{tpu_custom_call.1} parent=1 // loop_exit
      _
    %668 = vsyncpa [#allocation3], 1
    %s669 = scalar_lea.sflag [#allocation3], 1
    %670 = vsyncpa %s669, 1
    %671 = vsyncpa [#allocation6], 1
    %672 = vsyncpa [#allocation9], 1
    %673 = vsyncpa [#allocation4], 1
    %s674 = scalar_lea.sflag [#allocation4], 1
    %675 = vsyncpa %s674, 1

</llo_original>
